<compile_context>
chip_gen: v5e
topology: v5e:2x2
jax: 0.10.0
libtpu: 0.0.40
codegen_flags: <defaults>
</compile_context>

<pallas_src>
import itertools

import numpy as np
import jax
import jax.numpy as jnp
from jax.experimental import pallas as pl
from jax.experimental.pallas import tpu as pltpu


# ----------------------------------------------------------------------------
# Fused kernel: softmax -> cost -> brute-force assignment -> virt labels -> NLL
# ----------------------------------------------------------------------------
def _lin_assignment_kernel(ptabc_ref, ptabcol_ref, s_ref, rank_ref, out_ref):
    # ptabc_ref  : (K, K, P) f32   ptabc[c, r, p] = 1.0 iff PERMS[p][r] == c
    # ptabcol_ref: (K, P)    f32   ptabcol[r, p]  = float(PERMS[p][r])
    # s_ref      : (Bb, K, N) f32  raw scores, classes on sublanes, points on lanes
    # rank_ref   : (Bb, 1, N) i32  dense label rank per point (sorted-unique order)
    # out_ref    : (1, 8, 128) f32 partial sum over the block of nll_b * any_mismatch_b
    Bb, K, N = s_ref.shape
    P = ptabcol_ref.shape[-1]

    s = s_ref[...]                                              # (Bb,K,N)
    rank = rank_ref[...]                                        # (Bb,1,N)

    # softmax over the class axis (sublanes)
    m = jnp.max(s, axis=1, keepdims=True)                       # (Bb,1,N)
    e = jnp.exp(s - m)
    probs = e / jnp.sum(e, axis=1, keepdims=True)               # (Bb,K,N)

    # per-label membership one-hot from iota == rank (no host-side mask upload)
    iota_k = jax.lax.broadcasted_iota(jnp.int32, (Bb, K, N), 1)
    roh = (iota_k == rank).astype(jnp.float32)                  # (Bb,K,N); rows r>=L are 0

    # cost[b,r,c] = -(sum_n roh*probs) / (count_r + 1e-4), one batched MXU contraction
    sums = jax.lax.dot_general(roh, probs, (((2,), (2,)), ((0,), (0,))),
                               preferred_element_type=jnp.float32)       # (Bb,K,K)
    counts = jnp.sum(roh, axis=-1, keepdims=True)                        # (Bb,K,1)
    cost = -(sums / (counts + jnp.float32(1e-4)))                        # rows r>=L exactly 0

    # brute-force assignment: per-permutation total cost   pc[b,p] = sum_r cost[b,r,PERMS[p][r]]
    rowpc = cost[:, :, 0:1] * ptabc_ref[0]                               # (Bb,K,P)
    for c in range(1, K):
        rowpc = rowpc + cost[:, :, c:c + 1] * ptabc_ref[c]
    pc = jnp.sum(rowpc, axis=1, keepdims=True)                           # (Bb,1,P)

    # first-index argmin over permutations as a one-hot row per batch element
    pmin = jnp.min(pc, axis=-1, keepdims=True)                           # (Bb,1,1)
    iota_p = jax.lax.broadcasted_iota(jnp.int32, (Bb, 1, P), 2)
    first = jnp.min(jnp.where(pc <= pmin, iota_p, P), axis=-1, keepdims=True)
    w = (iota_p == first).astype(jnp.float32)                            # (Bb,1,P)

    # decode winning permutation: assigned column per label rank (exact small ints in f32)
    col = jnp.sum(w * ptabcol_ref[...], axis=-1, keepdims=True)          # (Bb,K,1)

    # per-point virtual labels (points with rank>=K fall back to 0, as in the reference)
    virt_i = jnp.sum(roh * col, axis=1, keepdims=True).astype(jnp.int32)  # (Bb,1,N)
    voh = (iota_k == virt_i).astype(jnp.float32)                          # (Bb,K,N)

    # NLL against virtual labels
    logp = jnp.log(s + jnp.float32(1e-27))                               # (Bb,K,N) EUP
    sel = jnp.sum(voh * logp, axis=1, keepdims=True)                     # (Bb,1,N)
    nll = -jnp.sum(sel, axis=-1, keepdims=True) * jnp.float32(1.0 / N)   # (Bb,1,1)

    # first-index argmax(s) vs virtual label: any mismatch gates the per-batch loss
    smax = jnp.max(s, axis=1, keepdims=True)
    pred_i = jnp.min(jnp.where(s >= smax, iota_k, K), axis=1, keepdims=True)   # (Bb,1,N)
    mism = jnp.sum((pred_i != virt_i).astype(jnp.float32), axis=-1, keepdims=True)
    flag = (mism > jnp.float32(0.0)).astype(jnp.float32)                 # (Bb,1,1)

    total = jnp.sum(nll * flag)                                          # scalar over block
    out_ref[...] = jnp.zeros(out_ref.shape, jnp.float32) + total         # lane-dense writeback


# ----------------------------------------------------------------------------
# Grid / block selection (generation-aware)
# ----------------------------------------------------------------------------
def _pick_block_b(B, max_bb=256):
    """Batch elements per grid step.  G=1 on single-TC chips (v5e/v6e);
    a balanced even G (ideally 2) on v7x; max_bb caps per-step VMEM footprint."""
    try:
        kind = jax.devices()[0].device_kind.lower()
    except Exception:
        kind = ""
    two_tc = "v7" in kind
    divisors = [d for d in range(1, B + 1) if B % d == 0 and d <= max_bb]
    bb = max(divisors)
    if two_tc:
        even = [d for d in divisors if (B // d) % 2 == 0]
        if even:
            bb = max(even)
    return bb


# ----------------------------------------------------------------------------
# Wrapper: host label->rank remap, static permutation tables, single pallas_call
# ----------------------------------------------------------------------------
def lin_assignment_loss(inst_embeddings, labels_gt):
    """Forward pass of LinAssignmentLoss.  Returns a shape-(1,) float32 array."""
    s = jnp.asarray(inst_embeddings, jnp.float32)           # [B, N, K]
    B, N, K = s.shape
    gt_np = np.asarray(labels_gt)

    # host: dense-rank remap of gt labels in sorted-unique order (mirrors torch.unique,
    # which the reference also runs on the host).  Ranks >= K are naturally excluded
    # from the cost matrix and fall back to virtual label 0 inside the kernel.
    rank_np = np.zeros((B, 1, N), np.int32)
    for b in range(B):
        _, inv = np.unique(gt_np[b], return_inverse=True)
        rank_np[b, 0] = np.asarray(inv).reshape(-1).astype(np.int32)

    # static permutation tables for the in-kernel exact assignment (K! perms; K=4 -> 24)
    perms = list(itertools.permutations(range(K)))
    P = len(perms)
    ptabc = np.zeros((K, K, P), np.float32)     # [c, r, p] = 1 iff perm p assigns row r -> col c
    ptabcol = np.zeros((K, P), np.float32)      # [r, p]    = column assigned to row r by perm p
    for p, perm in enumerate(perms):
        for r in range(K):
            ptabc[perm[r], r, p] = 1.0
            ptabcol[r, p] = float(perm[r])

    block_b = _pick_block_b(B)
    G = B // block_b

    s_t = jnp.transpose(s, (0, 2, 1))                        # [B, K, N] lane-dense

    partials = pl.pallas_call(
        _lin_assignment_kernel,
        out_shape=jax.ShapeDtypeStruct((G, 8, 128), jnp.float32),
        grid_spec=pltpu.PrefetchScalarGridSpec(
            num_scalar_prefetch=0,
            grid=(G,),
            in_specs=[
                pl.BlockSpec((K, K, P), lambda g: (0, 0, 0)),        # perm one-hot table
                pl.BlockSpec((K, P), lambda g: (0, 0)),              # perm column table
                pl.BlockSpec((block_b, K, N), lambda g: (g, 0, 0)),  # scores
                pl.BlockSpec((block_b, 1, N), lambda g: (g, 0, 0)),  # label ranks
            ],
            out_specs=pl.BlockSpec((1, 8, 128), lambda g: (g, 0, 0)),
        ),
        compiler_params=pltpu.CompilerParams(
            dimension_semantics=("parallel",)),
    )(jnp.asarray(ptabc), jnp.asarray(ptabcol), s_t, jnp.asarray(rank_np))

    loss = jnp.sum(partials[:, 0, 0]) / jnp.float32(B)       # tiny XLA reduce, no host loop
    return jnp.reshape(loss, (1,))


# ----------------------------------------------------------------------------
# Pure-numpy reference (mirrors the PyTorch module) for silent validation
# ----------------------------------------------------------------------------
def _linear_sum_assignment_bruteforce(cost):
    """Exact minimal-cost assignment for small rectangular matrices (L <= K)."""
    L, K = cost.shape
    best_perm, best_cost = None, np.inf
    for perm in itertools.permutations(range(K), L):
        c = float(sum(cost[r, perm[r]] for r in range(L)))
        if c < best_cost:
            best_cost, best_perm = c, perm
    return np.arange(L), np.asarray(best_perm)


def _ref_loss(s_np, gt_np):
    B, N, K = s_np.shape
    total = 0.0
    for b in range(B):
        s = s_np[b]
        gt = gt_np[b]
        labs = sorted(np.unique(gt).tolist())[:K]
        e = np.exp(s - s.max(-1, keepdims=True))
        probs = e / e.sum(-1, keepdims=True)
        cost = np.zeros((len(labs), K))
        for li, lab in enumerate(labs):
            msk = gt == lab
            cost[li] = -(probs[msk].sum(0) / (msk.sum() + 0.0001))
        rows, cols = _linear_sum_assignment_bruteforce(np.nan_to_num(cost))
        new_labels = np.zeros(N, np.int64)
        for r, c in zip(rows, cols):
            new_labels[gt == labs[r]] = c
        pred = s.argmax(-1)
        if np.any(new_labels != pred):
            total += float(np.mean(-np.log(s[np.arange(N), new_labels] + 1e-27)))
    return total / B


if __name__ == "__main__":
    B, N, K = 2, 256, 4
    key = jax.random.PRNGKey(0)
    k1, k2 = jax.random.split(key)
    # scores as probabilities (softmax of random logits), as expected by the
    # module's nll_loss(log(s + 1e-27), ...) usage
    logits = jax.random.normal(k1, (B, N, K), dtype=jnp.float32)
    inst_embeddings = jax.nn.softmax(logits, axis=-1)
    labels_gt = jax.random.randint(k2, (B, N), 0, K, dtype=jnp.int32)

    loss = lin_assignment_loss(inst_embeddings, labels_gt)
    loss = jax.block_until_ready(loss)

    ref = _ref_loss(np.asarray(inst_embeddings, np.float32), np.asarray(labels_gt))
    assert np.allclose(np.asarray(loss)[0], ref, rtol=1e-3, atol=1e-5), (np.asarray(loss), ref)

    print("KERNEL_OK")
</pallas_src>

<mosaic_0001>
module attributes {stable_mosaic.version = 11 : i64} {
  func.func @_lin_assignment_kernel(%arg0: i32, %arg1: memref<4x4x24xf32, #tpu.memory_space<vmem>>, %arg2: memref<4x24xf32, #tpu.memory_space<vmem>>, %arg3: memref<2x4x256xf32, #tpu.memory_space<vmem>>, %arg4: memref<2x1x256xi32, #tpu.memory_space<vmem>>, %arg5: memref<1x8x128xf32, #tpu.memory_space<vmem>>) attributes {dimension_semantics = [#tpu.dimension_semantics<parallel>], iteration_bounds = array<i64: 1>, scalar_prefetch = 0 : i64, scratch_operands = 0 : i64, tpu.core_type = #tpu.core_type<tc>, window_params = [{pipeline_mode = #tpu.pipeline_mode<synchronous>, transform_indices = @transform_0, window_bounds = array<i64: 4, 4, 24>}, {pipeline_mode = #tpu.pipeline_mode<synchronous>, transform_indices = @transform_1, window_bounds = array<i64: 4, 24>}, {transform_indices = @transform_2, window_bounds = array<i64: 2, 4, 256>}, {transform_indices = @transform_3, window_bounds = array<i64: 2, 1, 256>}, {transform_indices = @transform_4, window_bounds = array<i64: 1, 8, 128>}]} {
    %c0 = arith.constant 0 : index
    %c0_0 = arith.constant 0 : index
    %c0_1 = arith.constant 0 : index
    %0 = vector.load %arg3[%c0, %c0_0, %c0_1] : memref<2x4x256xf32, #tpu.memory_space<vmem>>, vector<2x4x256xf32>
    %c0_2 = arith.constant 0 : index
    %c0_3 = arith.constant 0 : index
    %c0_4 = arith.constant 0 : index
    %1 = vector.load %arg4[%c0_2, %c0_3, %c0_4] : memref<2x1x256xi32, #tpu.memory_space<vmem>>, vector<2x1x256xi32>
    %cst = arith.constant dense<0xFF800000> : vector<2x256xf32>
    %2 = vector.multi_reduction <maximumf>, %0, %cst [1] : vector<2x4x256xf32> to vector<2x256xf32>
    %3 = vector.shape_cast %2 : vector<2x256xf32> to vector<2x1x256xf32>
    %4 = vector.broadcast %3 : vector<2x1x256xf32> to vector<2x4x256xf32>
    %5 = arith.subf %0, %4 : vector<2x4x256xf32>
    %6 = math.exp %5 : vector<2x4x256xf32>
    %cst_5 = arith.constant dense<0.000000e+00> : vector<2x256xf32>
    %7 = vector.multi_reduction <add>, %6, %cst_5 [1] : vector<2x4x256xf32> to vector<2x256xf32>
    %8 = vector.shape_cast %7 : vector<2x256xf32> to vector<2x1x256xf32>
    %9 = vector.broadcast %8 : vector<2x1x256xf32> to vector<2x4x256xf32>
    %10 = arith.divf %6, %9 : vector<2x4x256xf32>
    %11 = tpu.iota {dimensions = array<i32: 1>} : vector<2x4x256xi32>
    %12 = vector.broadcast %1 : vector<2x1x256xi32> to vector<2x4x256xi32>
    %13 = arith.cmpi eq, %11, %12 : vector<2x4x256xi32>
    %14 = arith.extui %13 : vector<2x4x256xi1> to vector<2x4x256xi32>
    %15 = arith.sitofp %14 : vector<2x4x256xi32> to vector<2x4x256xf32>
    %cst_6 = arith.constant dense<0.000000e+00> : vector<2x4x4xf32>
    %16 = tpu.matmul %15, %10, %cst_6 {dimension_numbers = #tpu.dot_dimension_numbers<[2], [2], [1], [1], [0, 0, 0, 1, 1, 1], [0], [0]>} : vector<2x4x256xf32>, vector<2x4x256xf32>, vector<2x4x4xf32> -> vector<2x4x4xf32>
    %cst_7 = arith.constant dense<0.000000e+00> : vector<2x4xf32>
    %17 = vector.multi_reduction <add>, %15, %cst_7 [2] : vector<2x4x256xf32> to vector<2x4xf32>
    %18 = vector.shape_cast %17 : vector<2x4xf32> to vector<2x4x1xf32>
    %cst_8 = arith.constant 9.99999974E-5 : f32
    %19 = vector.broadcast %cst_8 : f32 to vector<2x4x1xf32>
    %20 = arith.addf %18, %19 : vector<2x4x1xf32>
    %21 = vector.broadcast %20 : vector<2x4x1xf32> to vector<2x4x4xf32>
    %22 = arith.divf %16, %21 : vector<2x4x4xf32>
    %cst_9 = arith.constant 0.000000e+00 : f32
    %23 = vector.broadcast %cst_9 : f32 to vector<2x4x4xf32>
    %24 = arith.subf %23, %22 : vector<2x4x4xf32>
    %25 = vector.extract_strided_slice %24 {offsets = [0, 0, 0], sizes = [2, 4, 1], strides = [1, 1, 1]} : vector<2x4x4xf32> to vector<2x4x1xf32>
    %c0_10 = arith.constant 0 : index
    %c0_11 = arith.constant 0 : index
    %c0_12 = arith.constant 0 : index
    %26 = vector.load %arg1[%c0_10, %c0_11, %c0_12] : memref<4x4x24xf32, #tpu.memory_space<vmem>>, vector<1x4x24xf32>
    %27 = vector.shape_cast %26 : vector<1x4x24xf32> to vector<4x24xf32>
    %28 = vector.shape_cast %27 : vector<4x24xf32> to vector<1x4x24xf32>
    %29 = vector.broadcast %25 : vector<2x4x1xf32> to vector<2x4x24xf32>
    %30 = vector.broadcast %28 : vector<1x4x24xf32> to vector<2x4x24xf32>
    %31 = arith.mulf %29, %30 : vector<2x4x24xf32>
    %32 = vector.extract_strided_slice %24 {offsets = [0, 0, 1], sizes = [2, 4, 1], strides = [1, 1, 1]} : vector<2x4x4xf32> to vector<2x4x1xf32>
    %c1 = arith.constant 1 : index
    %c0_13 = arith.constant 0 : index
    %c0_14 = arith.constant 0 : index
    %33 = vector.load %arg1[%c1, %c0_13, %c0_14] : memref<4x4x24xf32, #tpu.memory_space<vmem>>, vector<1x4x24xf32>
    %34 = vector.shape_cast %33 : vector<1x4x24xf32> to vector<4x24xf32>
    %35 = vector.shape_cast %34 : vector<4x24xf32> to vector<1x4x24xf32>
    %36 = vector.broadcast %32 : vector<2x4x1xf32> to vector<2x4x24xf32>
    %37 = vector.broadcast %35 : vector<1x4x24xf32> to vector<2x4x24xf32>
    %38 = arith.mulf %36, %37 : vector<2x4x24xf32>
    %39 = arith.addf %31, %38 : vector<2x4x24xf32>
    %40 = vector.extract_strided_slice %24 {offsets = [0, 0, 2], sizes = [2, 4, 1], strides = [1, 1, 1]} : vector<2x4x4xf32> to vector<2x4x1xf32>
    %c2 = arith.constant 2 : index
    %c0_15 = arith.constant 0 : index
    %c0_16 = arith.constant 0 : index
    %41 = vector.load %arg1[%c2, %c0_15, %c0_16] : memref<4x4x24xf32, #tpu.memory_space<vmem>>, vector<1x4x24xf32>
    %42 = vector.shape_cast %41 : vector<1x4x24xf32> to vector<4x24xf32>
    %43 = vector.shape_cast %42 : vector<4x24xf32> to vector<1x4x24xf32>
    %44 = vector.broadcast %40 : vector<2x4x1xf32> to vector<2x4x24xf32>
    %45 = vector.broadcast %43 : vector<1x4x24xf32> to vector<2x4x24xf32>
    %46 = arith.mulf %44, %45 : vector<2x4x24xf32>
    %47 = arith.addf %39, %46 : vector<2x4x24xf32>
    %48 = vector.extract_strided_slice %24 {offsets = [0, 0, 3], sizes = [2, 4, 1], strides = [1, 1, 1]} : vector<2x4x4xf32> to vector<2x4x1xf32>
    %c3 = arith.constant 3 : index
    %c0_17 = arith.constant 0 : index
    %c0_18 = arith.constant 0 : index
    %49 = vector.load %arg1[%c3, %c0_17, %c0_18] : memref<4x4x24xf32, #tpu.memory_space<vmem>>, vector<1x4x24xf32>
    %50 = vector.shape_cast %49 : vector<1x4x24xf32> to vector<4x24xf32>
    %51 = vector.shape_cast %50 : vector<4x24xf32> to vector<1x4x24xf32>
    %52 = vector.broadcast %48 : vector<2x4x1xf32> to vector<2x4x24xf32>
    %53 = vector.broadcast %51 : vector<1x4x24xf32> to vector<2x4x24xf32>
    %54 = arith.mulf %52, %53 : vector<2x4x24xf32>
    %55 = arith.addf %47, %54 : vector<2x4x24xf32>
    %cst_19 = arith.constant dense<0.000000e+00> : vector<2x24xf32>
    %56 = vector.multi_reduction <add>, %55, %cst_19 [1] : vector<2x4x24xf32> to vector<2x24xf32>
    %57 = vector.shape_cast %56 : vector<2x24xf32> to vector<2x1x24xf32>
    %cst_20 = arith.constant dense<0x7F800000> : vector<2x1xf32>
    %58 = vector.multi_reduction <minimumf>, %57, %cst_20 [2] : vector<2x1x24xf32> to vector<2x1xf32>
    %59 = vector.shape_cast %58 : vector<2x1xf32> to vector<2x1x1xf32>
    %60 = tpu.iota {dimensions = array<i32: 2>} : vector<2x1x24xi32>
    %61 = vector.broadcast %59 : vector<2x1x1xf32> to vector<2x1x24xf32>
    %62 = arith.cmpf ole, %57, %61 : vector<2x1x24xf32>
    %c24_i32 = arith.constant 24 : i32
    %63 = vector.broadcast %c24_i32 : i32 to vector<2x1x24xi32>
    %64 = arith.select %62, %60, %63 : vector<2x1x24xi1>, vector<2x1x24xi32>
    %cst_21 = arith.constant dense<2147483647> : vector<2x1xi32>
    %65 = vector.multi_reduction <minsi>, %64, %cst_21 [2] : vector<2x1x24xi32> to vector<2x1xi32>
    %66 = vector.shape_cast %65 : vector<2x1xi32> to vector<2x1x1xi32>
    %67 = vector.broadcast %66 : vector<2x1x1xi32> to vector<2x1x24xi32>
    %68 = arith.cmpi eq, %60, %67 : vector<2x1x24xi32>
    %69 = arith.extui %68 : vector<2x1x24xi1> to vector<2x1x24xi32>
    %70 = arith.sitofp %69 : vector<2x1x24xi32> to vector<2x1x24xf32>
    %c0_22 = arith.constant 0 : index
    %c0_23 = arith.constant 0 : index
    %71 = vector.load %arg2[%c0_22, %c0_23] : memref<4x24xf32, #tpu.memory_space<vmem>>, vector<4x24xf32>
    %72 = vector.shape_cast %71 : vector<4x24xf32> to vector<1x4x24xf32>
    %73 = vector.broadcast %70 : vector<2x1x24xf32> to vector<2x4x24xf32>
    %74 = vector.broadcast %72 : vector<1x4x24xf32> to vector<2x4x24xf32>
    %75 = arith.mulf %73, %74 : vector<2x4x24xf32>
    %cst_24 = arith.constant dense<0.000000e+00> : vector<2x4xf32>
    %76 = vector.multi_reduction <add>, %75, %cst_24 [2] : vector<2x4x24xf32> to vector<2x4xf32>
    %77 = vector.shape_cast %76 : vector<2x4xf32> to vector<2x4x1xf32>
    %78 = vector.broadcast %77 : vector<2x4x1xf32> to vector<2x4x256xf32>
    %79 = arith.mulf %15, %78 : vector<2x4x256xf32>
    %cst_25 = arith.constant dense<0.000000e+00> : vector<2x256xf32>
    %80 = vector.multi_reduction <add>, %79, %cst_25 [1] : vector<2x4x256xf32> to vector<2x256xf32>
    %81 = vector.shape_cast %80 : vector<2x256xf32> to vector<2x1x256xf32>
    %82 = arith.fptosi %81 : vector<2x1x256xf32> to vector<2x1x256xi32>
    %83 = vector.broadcast %82 : vector<2x1x256xi32> to vector<2x4x256xi32>
    %84 = arith.cmpi eq, %11, %83 : vector<2x4x256xi32>
    %85 = arith.extui %84 : vector<2x4x256xi1> to vector<2x4x256xi32>
    %86 = arith.sitofp %85 : vector<2x4x256xi32> to vector<2x4x256xf32>
    %cst_26 = arith.constant 1.000000e-27 : f32
    %87 = vector.broadcast %cst_26 : f32 to vector<2x4x256xf32>
    %88 = arith.addf %0, %87 : vector<2x4x256xf32>
    %89 = math.log %88 : vector<2x4x256xf32>
    %90 = arith.mulf %86, %89 : vector<2x4x256xf32>
    %cst_27 = arith.constant dense<0.000000e+00> : vector<2x256xf32>
    %91 = vector.multi_reduction <add>, %90, %cst_27 [1] : vector<2x4x256xf32> to vector<2x256xf32>
    %92 = vector.shape_cast %91 : vector<2x256xf32> to vector<2x1x256xf32>
    %cst_28 = arith.constant dense<0.000000e+00> : vector<2x1xf32>
    %93 = vector.multi_reduction <add>, %92, %cst_28 [2] : vector<2x1x256xf32> to vector<2x1xf32>
    %94 = vector.shape_cast %93 : vector<2x1xf32> to vector<2x1x1xf32>
    %cst_29 = arith.constant 0.000000e+00 : f32
    %95 = vector.broadcast %cst_29 : f32 to vector<2x1x1xf32>
    %96 = arith.subf %95, %94 : vector<2x1x1xf32>
    %cst_30 = arith.constant 3.906250e-03 : f32
    %97 = vector.broadcast %cst_30 : f32 to vector<2x1x1xf32>
    %98 = arith.mulf %96, %97 : vector<2x1x1xf32>
    %cst_31 = arith.constant dense<0xFF800000> : vector<2x256xf32>
    %99 = vector.multi_reduction <maximumf>, %0, %cst_31 [1] : vector<2x4x256xf32> to vector<2x256xf32>
    %100 = vector.shape_cast %99 : vector<2x256xf32> to vector<2x1x256xf32>
    %101 = vector.broadcast %100 : vector<2x1x256xf32> to vector<2x4x256xf32>
    %102 = arith.cmpf oge, %0, %101 : vector<2x4x256xf32>
    %c4_i32 = arith.constant 4 : i32
    %103 = vector.broadcast %c4_i32 : i32 to vector<2x4x256xi32>
    %104 = arith.select %102, %11, %103 : vector<2x4x256xi1>, vector<2x4x256xi32>
    %cst_32 = arith.constant dense<2147483647> : vector<2x256xi32>
    %105 = vector.multi_reduction <minsi>, %104, %cst_32 [1] : vector<2x4x256xi32> to vector<2x256xi32>
    %106 = vector.shape_cast %105 : vector<2x256xi32> to vector<2x1x256xi32>
    %107 = arith.cmpi ne, %106, %82 : vector<2x1x256xi32>
    %108 = arith.extui %107 : vector<2x1x256xi1> to vector<2x1x256xi32>
    %109 = arith.sitofp %108 : vector<2x1x256xi32> to vector<2x1x256xf32>
    %cst_33 = arith.constant dense<0.000000e+00> : vector<2x1xf32>
    %110 = vector.multi_reduction <add>, %109, %cst_33 [2] : vector<2x1x256xf32> to vector<2x1xf32>
    %111 = vector.shape_cast %110 : vector<2x1xf32> to vector<2x1x1xf32>
    %cst_34 = arith.constant 0.000000e+00 : f32
    %112 = vector.broadcast %cst_34 : f32 to vector<2x1x1xf32>
    %113 = arith.cmpf ogt, %111, %112 : vector<2x1x1xf32>
    %114 = arith.extui %113 : vector<2x1x1xi1> to vector<2x1x1xi32>
    %115 = arith.sitofp %114 : vector<2x1x1xi32> to vector<2x1x1xf32>
    %116 = arith.mulf %98, %115 : vector<2x1x1xf32>
    %117 = vector.shape_cast %116 : vector<2x1x1xf32> to vector<1x2x1x1xf32>
    %cst_35 = arith.constant dense<0.000000e+00> : vector<1xf32>
    %118 = vector.multi_reduction <add>, %117, %cst_35 [1, 2, 3] : vector<1x2x1x1xf32> to vector<1xf32>
    %119 = vector.shape_cast %118 : vector<1xf32> to vector<1x1x1x1xf32>
    %120 = vector.extract %119[0, 0, 0, 0] : f32 from vector<1x1x1x1xf32>
    %cst_36 = arith.constant 0.000000e+00 : f32
    %121 = vector.broadcast %cst_36 : f32 to vector<1x8x128xf32>
    %122 = vector.broadcast %120 : f32 to vector<1x8x128xf32>
    %123 = arith.addf %121, %122 : vector<1x8x128xf32>
    %c0_37 = arith.constant 0 : index
    %c0_38 = arith.constant 0 : index
    %c0_39 = arith.constant 0 : index
    %124 = vector.load %arg5[%c0_37, %c0_38, %c0_39] : memref<1x8x128xf32, #tpu.memory_space<vmem>>, vector<1x8x128xf32>
    tpu.vector_store %arg5[%c0_37, %c0_38, %c0_39], %123 {strides = array<i32>} : memref<1x8x128xf32, #tpu.memory_space<vmem>>, vector<1x8x128xf32>,
    return
  }
  func.func @transform_0(%arg0: i32) -> (i32, i32, i32) {
    %c0_i32 = arith.constant 0 : i32
    %c0_i32_0 = arith.constant 0 : i32
    %c0_i32_1 = arith.constant 0 : i32
    %c0_i32_2 = arith.constant 0 : i32
    return %c0_i32, %c0_i32_0, %c0_i32_1 : i32, i32, i32
  }
  func.func @transform_1(%arg0: i32) -> (i32, i32) {
    %c0_i32 = arith.constant 0 : i32
    %c0_i32_0 = arith.constant 0 : i32
    %c0_i32_1 = arith.constant 0 : i32
    return %c0_i32, %c0_i32_0 : i32, i32
  }
  func.func @transform_2(%arg0: i32) -> (i32, i32, i32) {
    %c0_i32 = arith.constant 0 : i32
    %c0_i32_0 = arith.constant 0 : i32
    %c0_i32_1 = arith.constant 0 : i32
    return %arg0, %c0_i32, %c0_i32_0 : i32, i32, i32
  }
  func.func @transform_3(%arg0: i32) -> (i32, i32, i32) {
    %c0_i32 = arith.constant 0 : i32
    %c0_i32_0 = arith.constant 0 : i32
    %c0_i32_1 = arith.constant 0 : i32
    return %arg0, %c0_i32, %c0_i32_0 : i32, i32, i32
  }
  func.func @transform_4(%arg0: i32) -> (i32, i32, i32) {
    %c0_i32 = arith.constant 0 : i32
    %c0_i32_0 = arith.constant 0 : i32
    %c0_i32_1 = arith.constant 0 : i32
    return %arg0, %c0_i32, %c0_i32_0 : i32, i32, i32
  }
}

</mosaic_0001>

<llo_original>
// kernel: tpu_custom_call.1
$region0: #{tpu_custom_call.1}
  #allocation0 [shape = 'u32[]', space=smem, size = 0x4, offset = 0x4, fixed_abs, tag = 'smem constant byte address 0x4 - core index']
  #allocation1 [shape = 'u32[72,128]{1,0:T(1,128)}', space=vmem, size = 0x9000, scoped, tag = 'internal scratch']
  %s0 = inlined_call_operand.hbm [shape: f32[4,4,24], index: 0, kind: input, shape index: {}]
  %s1 = inlined_call_operand.hbm [shape: f32[4,24], index: 1, kind: input, shape index: {}]
  %s2 = inlined_call_operand.hbm [shape: f32[2,4,256], index: 2, kind: input, shape index: {}]
  %s3 = inlined_call_operand.hbm [shape: s32[2,1,256], index: 3, kind: input, shape index: {}]
  %s4 = inlined_call_operand.hbm [shape: f32[1,8,128], index: 4, kind: output, shape index: {}]
  %s5 = sld [smem:[#allocation0]]
  $region42: #{tpu_custom_call.1} parent=0
    _
  %s7 = ssub.s32 1, %s5
  %s8 = scalar_select 0, %s7, %s5
  $region1: #{tpu_custom_call.1} parent=0
    #allocation2 [shape = 'u8[8192]{0}', space=vmem, size = 0x2000, scoped, tag = 'input window, operand 0, single buffered']
    #allocation3 [shape = 's32[1]{0}', space=sflag, size = 0x4, scoped, tag = 'scoped memory for tpu_custom_call.1']
    #allocation4 [shape = 's32[1]{0}', space=sflag, size = 0x4, scoped, tag = 'scoped memory for tpu_custom_call.1']
    #allocation5 [shape = 'u8[2048]{0}', space=vmem, size = 0x800, scoped, tag = 'input window, operand 1, single buffered']
    #allocation6 [shape = 's32[1]{0}', space=sflag, size = 0x4, scoped, tag = 'scoped memory for tpu_custom_call.1']
    #allocation7 [shape = 'u8[8192]{0}', space=vmem, size = 0x2000, scoped, tag = 'input window, operand 2, single buffered']
    #allocation8 [shape = 'u8[2048]{0}', space=vmem, size = 0x800, scoped, tag = 'input window, operand 3, single buffered']
    #allocation9 [shape = 's32[1]{0}', space=sflag, size = 0x4, scoped, tag = 'scoped memory for tpu_custom_call.1']
    #allocation10 [shape = 'u8[4096]{0}', space=vmem, size = 0x1000, scoped, tag = 'output window, operand 0, single buffered']
    %9 = vsyncpa [#allocation3], 0
    %10 = vsyncpa [#allocation6], 0
    %11 = vsyncpa [#allocation9], 0
    %12 = vsyncpa [#allocation4], 0
    // Predicated region
    $region2: #{tpu_custom_call.1} parent=1 // pred_check
      _
    $region3: #{tpu_custom_call.1} parent=1 // pred_check_branch
      %14 = sbr.rel (0) target = $region5
    $region4: #{tpu_custom_call.1} parent=1 // pred_region
      %16 = vsyncadd [#allocation3], 0
      %s17 = sshll.u32 %s0, 4
      %s18 = int_to_ptr.hbm [resolvable:$true] %s17
      %s19 = sshll.u32 [#allocation2], 4
      %s20 = int_to_ptr.vmem [resolvable:$true] %s19
      %25 = dma.hbm_to_vmem [thread:$0]  %s18, 256, %s20, [#allocation3], 64, 64, 4
    $region5: #{tpu_custom_call.1} parent=1 // pred_fallthru
      _
    // Predicated region
    $region6: #{tpu_custom_call.1} parent=1 // pred_check
      _
    $region7: #{tpu_custom_call.1} parent=1 // pred_check_branch
      %27 = sbr.rel (0) target = $region9
    $region8: #{tpu_custom_call.1} parent=1 // pred_region
      %29 = vsyncadd [#allocation6], 0
      %s31 = sshll.u32 %s1, 4
      %s32 = int_to_ptr.hbm [resolvable:$true] %s31
      %s33 = sshll.u32 [#allocation5], 4
      %s34 = int_to_ptr.vmem [resolvable:$true] %s33
      %36 = dma.hbm_to_vmem [thread:$0]  %s32, 64, %s34, [#allocation6]
    $region9: #{tpu_custom_call.1} parent=1 // pred_fallthru
      _
    // Predicated region
    $region10: #{tpu_custom_call.1} parent=1 // pred_check
      _
    $region11: #{tpu_custom_call.1} parent=1 // pred_check_branch
      %38 = sbr.rel (0) target = $region13
    $region12: #{tpu_custom_call.1} parent=1 // pred_region
      %40 = vsyncadd [#allocation6], 0
      %s41 = sshll.u32 %s2, 4
      %s42 = int_to_ptr.hbm [resolvable:$true] %s41
      %s43 = sshll.u32 [#allocation7], 4
      %s44 = int_to_ptr.vmem [resolvable:$true] %s43
      %49 = dma.hbm_to_vmem [thread:$0]  %s42, 256, %s44, [#allocation6], 128, 128, 8
    $region13: #{tpu_custom_call.1} parent=1 // pred_fallthru
      _
    // Predicated region
    $region14: #{tpu_custom_call.1} parent=1 // pred_check
      _
    $region15: #{tpu_custom_call.1} parent=1 // pred_check_branch
      %51 = sbr.rel (0) target = $region17
    $region16: #{tpu_custom_call.1} parent=1 // pred_region
      %53 = vsyncadd [#allocation9], 0
      %s54 = sshll.u32 %s3, 4
      %s55 = int_to_ptr.hbm [resolvable:$true] %s54
      %s56 = sshll.u32 [#allocation8], 4
      %s57 = int_to_ptr.vmem [resolvable:$true] %s56
      %62 = dma.hbm_to_vmem [thread:$0]  %s55, 64, %s57, [#allocation9], 32, 32, 2
    $region17: #{tpu_custom_call.1} parent=1 // pred_fallthru
      _
    // Predicated region
    $region18: #{tpu_custom_call.1} parent=1 // pred_check
      _
    $region19: #{tpu_custom_call.1} parent=1 // pred_check_branch
      %64 = sbr.rel (0) target = $region21
    $region20: #{tpu_custom_call.1} parent=1 // pred_region
      %66 = dma.done [#allocation3], 256
    $region21: #{tpu_custom_call.1} parent=1 // pred_fallthru
      _
    // Predicated region
    $region22: #{tpu_custom_call.1} parent=1 // pred_check
      _
    $region23: #{tpu_custom_call.1} parent=1 // pred_check_branch
      %68 = sbr.rel (0) target = $region25
    $region24: #{tpu_custom_call.1} parent=1 // pred_region
      %70 = dma.done [#allocation6], 64
    $region25: #{tpu_custom_call.1} parent=1 // pred_fallthru
      _
    // Predicated region
    $region26: #{tpu_custom_call.1} parent=1 // pred_check
      _
    $region27: #{tpu_custom_call.1} parent=1 // pred_check_branch
      %72 = sbr.rel (0) target = $region29
    $region28: #{tpu_custom_call.1} parent=1 // pred_region
      %74 = dma.done [#allocation6], 256
    $region29: #{tpu_custom_call.1} parent=1 // pred_fallthru
      _
    // Predicated region
    $region30: #{tpu_custom_call.1} parent=1 // pred_check
      _
    $region31: #{tpu_custom_call.1} parent=1 // pred_check_branch
      %76 = sbr.rel (0) target = $region33
    $region32: #{tpu_custom_call.1} parent=1 // pred_region
      %78 = dma.done [#allocation9], 64
    $region33: #{tpu_custom_call.1} parent=1 // pred_fallthru
      _
    %v79 = vld [vmem:[#allocation7] sm:$0xff]
    %v80 = vld [vmem:[#allocation7 + $0x8] sm:$0xff]
    %v81 = vld [vmem:[#allocation8] sm:$0x3]
    %v82 = vld [vmem:[#allocation8 + $0x2] sm:$0x3]
    %85 = vst [vmem:[#allocation1] ss:$2 sm:$0xff] %v79
    %v86 = vld.sshfl [vmem:[#allocation1] sm:$0xff pattern:$0x75316420]
    %v87 = vld.sshfl [vmem:[#allocation1 + $0x8] sm:$0xff pattern:$0x75316420]
    %s88 = scalar_lea.vmem [#allocation1], 16
    %89 = vst [vmem:[%s88] ss:$2 sm:$0xff] %v80
    %v90 = vld.sshfl [vmem:[#allocation1 + $0x10] sm:$0xff pattern:$0x75316420]
    %v91 = vld.sshfl [vmem:[#allocation1 + $0x18] sm:$0xff pattern:$0x75316420]
    %vm96 = vcmask 1043456
    %v97 = vsel %vm96, %v86, -inf
    %v98 = vrot.slane %v97, 4
    %v99 = vmax.f32 %v97, %v98
    %v100 = vrot.slane %v99, 2
    %v101 = vmax.f32 %v99, %v100
    %v102 = vrot.slane %v101, 1
    %v103 = vmax.f32 %v101, %v102
    %v104 = vsel %vm96, %v87, -inf
    %v105 = vrot.slane %v104, 4
    %v106 = vmax.f32 %v104, %v105
    %v107 = vrot.slane %v106, 2
    %v108 = vmax.f32 %v106, %v107
    %v109 = vrot.slane %v108, 1
    %v110 = vmax.f32 %v108, %v109
    %v111 = vsel %vm96, %v90, -inf
    %v112 = vrot.slane %v111, 4
    %v113 = vmax.f32 %v111, %v112
    %v114 = vrot.slane %v113, 2
    %v115 = vmax.f32 %v113, %v114
    %v116 = vrot.slane %v115, 1
    %v117 = vmax.f32 %v115, %v116
    %v118 = vsel %vm96, %v91, -inf
    %v119 = vrot.slane %v118, 4
    %v120 = vmax.f32 %v118, %v119
    %v121 = vrot.slane %v120, 2
    %v122 = vmax.f32 %v120, %v121
    %v123 = vrot.slane %v122, 1
    %v124 = vmax.f32 %v122, %v123
    %v129 = vrot.slane %v110, 4
    %v130 = vrot.slane %v124, 4
    %v131 = vsel %vm96, %v103, %v129
    %v132 = vsel %vm96, %v117, %v130
    %v135 = vsub.f32 %v79, %v131
    %v136 = vsub.f32 %v80, %v132
    %v137 = vmul.f32 %v135, 1.442695
    %v138 = vpow.pop %v137
    %v139 = vmul.f32 %v136, 1.442695
    %v140 = vpow.pop %v139
    %143 = vst [vmem:[#allocation1] ss:$2 sm:$0xff] %v138
    %v144 = vld.sshfl [vmem:[#allocation1] sm:$0xff pattern:$0x75316420]
    %v145 = vld.sshfl [vmem:[#allocation1 + $0x8] sm:$0xff pattern:$0x75316420]
    %s146 = scalar_lea.vmem [#allocation1], 16
    %147 = vst [vmem:[%s146] ss:$2 sm:$0xff] %v140
    %v148 = vld.sshfl [vmem:[#allocation1 + $0x10] sm:$0xff pattern:$0x75316420]
    %v149 = vld.sshfl [vmem:[#allocation1 + $0x18] sm:$0xff pattern:$0x75316420]
    %v154 = vsel %vm96, %v144, 0.0
    %v155 = vrot.slane %v154, 4
    %v156 = vadd.f32 %v154, %v155
    %v157 = vrot.slane %v156, 2
    %v158 = vadd.f32 %v156, %v157
    %v159 = vrot.slane %v158, 1
    %v160 = vadd.f32 %v158, %v159
    %v161 = vsel %vm96, %v145, 0.0
    %v162 = vrot.slane %v161, 4
    %v163 = vadd.f32 %v161, %v162
    %v164 = vrot.slane %v163, 2
    %v165 = vadd.f32 %v163, %v164
    %v166 = vrot.slane %v165, 1
    %v167 = vadd.f32 %v165, %v166
    %v168 = vsel %vm96, %v148, 0.0
    %v169 = vrot.slane %v168, 4
    %v170 = vadd.f32 %v168, %v169
    %v171 = vrot.slane %v170, 2
    %v172 = vadd.f32 %v170, %v171
    %v173 = vrot.slane %v172, 1
    %v174 = vadd.f32 %v172, %v173
    %v175 = vsel %vm96, %v149, 0.0
    %v176 = vrot.slane %v175, 4
    %v177 = vadd.f32 %v175, %v176
    %v178 = vrot.slane %v177, 2
    %v179 = vadd.f32 %v177, %v178
    %v180 = vrot.slane %v179, 1
    %v181 = vadd.f32 %v179, %v180
    %v186 = vrot.slane %v167, 4
    %v187 = vrot.slane %v181, 4
    %v188 = vsel %vm96, %v160, %v186
    %v189 = vsel %vm96, %v174, %v187
    %v192 = vrcp.pop %v188
    %v193 = vmul.f32 %v188, %v192
    %v194 = vsub.f32 1.0, %v193
    %v195 = vmul.f32 %v192, %v194
    %v196 = vadd.f32 %v192, %v195
    %vm197 = vweird.f32 %v188
    %vm198 = vweird.f32 %v192
    %vm199 = vmor %vm197, %vm198
    %v200 = vsel %vm199, %v192, %v196
    %v201 = vand.u32 2147483647, %v188
    %vm202 = vcmp.eq.f32.partialorder %v201, 8.507059e+37
    %v203 = vand.u32 %v188, 2147483648
    %v204 = vor.u32 1.1754944e-38, %v203
    %v205 = vsel %vm202, %v204, %v200
    %v206 = vmul.f32 %v138, %v205
    %v207 = vrcp.pop %v189
    %v208 = vmul.f32 %v189, %v207
    %v209 = vsub.f32 1.0, %v208
    %v210 = vmul.f32 %v207, %v209
    %v211 = vadd.f32 %v207, %v210
    %vm212 = vweird.f32 %v189
    %vm213 = vweird.f32 %v207
    %vm214 = vmor %vm212, %vm213
    %v215 = vsel %vm214, %v207, %v211
    %v216 = vand.u32 2147483647, %v189
    %vm217 = vcmp.eq.f32.partialorder %v216, 8.507059e+37
    %v218 = vand.u32 %v189, 2147483648
    %v219 = vor.u32 1.1754944e-38, %v218
    %v220 = vsel %vm217, %v219, %v215
    %v221 = vmul.f32 %v140, %v220
    %v222 = vlaneseq
    %v223 = vshrl.u32 %v222, 7
    %v224 = vperm.slane %v81, 0
    %v225 = vperm.slane %v81, 1
    %v226 = vperm.slane %v82, 0
    %v227 = vperm.slane %v82, 1
    %vm228 = vcmp.eq.s32.totalorder %v223, %v224
    %vm229 = vcmp.eq.s32.totalorder %v223, %v225
    %vm230 = vcmp.eq.s32.totalorder %v223, %v226
    %vm231 = vcmp.eq.s32.totalorder %v223, %v227
    %v232 = vsel %vm228, 1, 0
    %v233 = vsel %vm229, 1, 0
    %v234 = vsel %vm230, 1, 0
    %v235 = vsel %vm231, 1, 0
    %v236 = vcvt.s32.f32 %v232
    %v237 = vcvt.s32.f32 %v233
    %v238 = vcvt.s32.f32 %v234
    %v239 = vcvt.s32.f32 %v235
    %241 = vst [vmem:[#allocation1] ss:$2 sm:$0xff] %v206
    %v242 = vld.sshfl [vmem:[#allocation1] sm:$0xff pattern:$0x75316420]
    %v243 = vld.sshfl [vmem:[#allocation1 + $0x8] sm:$0xff pattern:$0x75316420]
    %246 = vmatpush.xpose.msra.mxu0 0.0
    %247 = vmatpush.xpose.msra.mxu0 0.0
    %248 = vmatpush.xpose.msra.mxu0 0.0
    %249 = vmatpush.xpose.msra.mxu0 0.0
    %250 = vmatpush.xpose.msra.mxu0 0.0
    %251 = vmatpush.xpose.msra.mxu0 0.0
    %252 = vmatpush.xpose.msra.mxu0 0.0
    %253 = vmatpush.xpose.msra.mxu0 0.0
    %254 = vmatpush.xpose.msra.mxu0 0.0
    %255 = vmatpush.xpose.msra.mxu0 0.0
    %256 = vmatpush.xpose.msra.mxu0 0.0
    %257 = vmatpush.xpose.msra.mxu0 0.0
    %258 = vmatpush.xpose.msra.mxu0 0.0
    %259 = vmatpush.xpose.msra.mxu0 0.0
    %260 = vmatpush.xpose.msra.mxu0 0.0
    %261 = vmatpush.xpose.msra.mxu0 %v242
    %262 = vmatmul.f32.gmra.mxu0 %v236
    %v263 = vpop.f32.mrf.mxu0
    %v264 = vadd.f32 0.0, %v263
    %265 = vdwg.mxu0
    %266 = vmatpush.xpose.msra.mxu0 0.0
    %267 = vmatpush.xpose.msra.mxu0 0.0
    %268 = vmatpush.xpose.msra.mxu0 0.0
    %269 = vmatpush.xpose.msra.mxu0 0.0
    %270 = vmatpush.xpose.msra.mxu0 0.0
    %271 = vmatpush.xpose.msra.mxu0 0.0
    %272 = vmatpush.xpose.msra.mxu0 0.0
    %273 = vmatpush.xpose.msra.mxu0 0.0
    %274 = vmatpush.xpose.msra.mxu0 0.0
    %275 = vmatpush.xpose.msra.mxu0 0.0
    %276 = vmatpush.xpose.msra.mxu0 0.0
    %277 = vmatpush.xpose.msra.mxu0 0.0
    %278 = vmatpush.xpose.msra.mxu0 0.0
    %279 = vmatpush.xpose.msra.mxu0 0.0
    %280 = vmatpush.xpose.msra.mxu0 0.0
    %281 = vmatpush.xpose.msra.mxu0 %v243
    %282 = vmatmul.f32.gmra.mxu0 %v237
    %v283 = vpop.f32.mrf.mxu0
    %v284 = vadd.f32 %v264, %v283
    %285 = vdwg.mxu0
    %287 = vst [vmem:[#allocation1] ss:$2 sm:$0xff] %v221
    %v288 = vld.sshfl [vmem:[#allocation1] sm:$0xff pattern:$0x75316420]
    %v289 = vld.sshfl [vmem:[#allocation1 + $0x8] sm:$0xff pattern:$0x75316420]
    %292 = vmatpush.xpose.msra.mxu0 0.0
    %293 = vmatpush.xpose.msra.mxu0 0.0
    %294 = vmatpush.xpose.msra.mxu0 0.0
    %295 = vmatpush.xpose.msra.mxu0 0.0
    %296 = vmatpush.xpose.msra.mxu0 0.0
    %297 = vmatpush.xpose.msra.mxu0 0.0
    %298 = vmatpush.xpose.msra.mxu0 0.0
    %299 = vmatpush.xpose.msra.mxu0 0.0
    %300 = vmatpush.xpose.msra.mxu0 0.0
    %301 = vmatpush.xpose.msra.mxu0 0.0
    %302 = vmatpush.xpose.msra.mxu0 0.0
    %303 = vmatpush.xpose.msra.mxu0 0.0
    %304 = vmatpush.xpose.msra.mxu0 0.0
    %305 = vmatpush.xpose.msra.mxu0 0.0
    %306 = vmatpush.xpose.msra.mxu0 0.0
    %307 = vmatpush.xpose.msra.mxu0 %v288
    %308 = vmatmul.f32.gmra.mxu0 %v238
    %v309 = vpop.f32.mrf.mxu0
    %v310 = vadd.f32 0.0, %v309
    %311 = vdwg.mxu0
    %312 = vmatpush.xpose.msra.mxu0 0.0
    %313 = vmatpush.xpose.msra.mxu0 0.0
    %314 = vmatpush.xpose.msra.mxu0 0.0
    %315 = vmatpush.xpose.msra.mxu0 0.0
    %316 = vmatpush.xpose.msra.mxu0 0.0
    %317 = vmatpush.xpose.msra.mxu0 0.0
    %318 = vmatpush.xpose.msra.mxu0 0.0
    %319 = vmatpush.xpose.msra.mxu0 0.0
    %320 = vmatpush.xpose.msra.mxu0 0.0
    %321 = vmatpush.xpose.msra.mxu0 0.0
    %322 = vmatpush.xpose.msra.mxu0 0.0
    %323 = vmatpush.xpose.msra.mxu0 0.0
    %324 = vmatpush.xpose.msra.mxu0 0.0
    %325 = vmatpush.xpose.msra.mxu0 0.0
    %326 = vmatpush.xpose.msra.mxu0 0.0
    %327 = vmatpush.xpose.msra.mxu0 %v289
    %328 = vmatmul.f32.gmra.mxu0 %v239
    %v329 = vpop.f32.mrf.mxu0
    %v330 = vadd.f32 %v310, %v329
    %331 = vdwg.mxu0
    %v332 = vsel %vm96, %v236, 0.0
    %v333 = vsel %vm96, %v237, 0.0
    %v334 = vadd.f32 %v332, %v333
    %335 = vadd.xlane.f32.xlu0 %v334
    %v336 = vpop.xlane.xlu0 %335
    %v337 = vsel %vm96, %v238, 0.0
    %v338 = vsel %vm96, %v239, 0.0
    %v339 = vadd.f32 %v337, %v338
    %340 = vadd.xlane.f32.xlu0 %v339
    %v341 = vpop.xlane.xlu0 %340
    %v342 = vadd.f32 %v336, 0.0001
    %v343 = vadd.f32 %v341, 0.0001
    %v344 = vrcp.pop %v342
    %v345 = vmul.f32 %v342, %v344
    %v346 = vsub.f32 1.0, %v345
    %v347 = vmul.f32 %v344, %v346
    %v348 = vadd.f32 %v344, %v347
    %vm349 = vweird.f32 %v342
    %vm350 = vweird.f32 %v344
    %vm351 = vmor %vm349, %vm350
    %v352 = vsel %vm351, %v344, %v348
    %v353 = vand.u32 2147483647, %v342
    %vm354 = vcmp.eq.f32.partialorder %v353, 8.507059e+37
    %v355 = vand.u32 %v342, 2147483648
    %v356 = vor.u32 1.1754944e-38, %v355
    %v357 = vsel %vm354, %v356, %v352
    %v358 = vmul.f32 %v284, %v357
    %v359 = vrcp.pop %v343
    %v360 = vmul.f32 %v343, %v359
    %v361 = vsub.f32 1.0, %v360
    %v362 = vmul.f32 %v359, %v361
    %v363 = vadd.f32 %v359, %v362
    %vm364 = vweird.f32 %v343
    %vm365 = vweird.f32 %v359
    %vm366 = vmor %vm364, %vm365
    %v367 = vsel %vm366, %v359, %v363
    %v368 = vand.u32 2147483647, %v343
    %vm369 = vcmp.eq.f32.partialorder %v368, 8.507059e+37
    %v370 = vand.u32 %v343, 2147483648
    %v371 = vor.u32 1.1754944e-38, %v370
    %v372 = vsel %vm369, %v371, %v367
    %v373 = vmul.f32 %v330, %v372
    %v374 = vsub.f32 0.0, %v358
    %v375 = vsub.f32 0.0, %v373
    %v376 = vld [vmem:[#allocation2] sm:$0xf]
    %378 = vset.pattern.permute.xlu0 0
    %379 = vperm.xlu0 %378, %v374
    %v380 = vpop.permute.xlu0 %379
    %383 = vset.pattern.permute.xlu0 0
    %384 = vperm.xlu0 %383, %v375
    %v385 = vpop.permute.xlu0 %384
    %v387 = vmul.f32 %v380, %v376
    %v388 = vmul.f32 %v385, %v376
    %s389 = scalar_lea.vmem [#allocation2], 4
    %v390 = vld [vmem:[%s389] sm:$0xf]
    %391 = vset.pattern.permute.xlu0 1
    %392 = vperm.xlu0 %391, %v374
    %v393 = vpop.permute.xlu0 %392
    %395 = vset.pattern.permute.xlu0 1
    %396 = vperm.xlu0 %395, %v375
    %v397 = vpop.permute.xlu0 %396
    %v399 = vmul.f32 %v393, %v390
    %v400 = vmul.f32 %v397, %v390
    %v401 = vadd.f32 %v387, %v399
    %v402 = vadd.f32 %v388, %v400
    %s403 = scalar_lea.vmem [#allocation2], 8
    %v404 = vld [vmem:[%s403] sm:$0xf]
    %405 = vset.pattern.permute.xlu0 2
    %406 = vperm.xlu0 %405, %v374
    %v407 = vpop.permute.xlu0 %406
    %409 = vset.pattern.permute.xlu0 2
    %410 = vperm.xlu0 %409, %v375
    %v411 = vpop.permute.xlu0 %410
    %v413 = vmul.f32 %v407, %v404
    %v414 = vmul.f32 %v411, %v404
    %v415 = vadd.f32 %v401, %v413
    %v416 = vadd.f32 %v402, %v414
    %s417 = scalar_lea.vmem [#allocation2], 12
    %v418 = vld [vmem:[%s417] sm:$0xf]
    %419 = vset.pattern.permute.xlu0 3
    %420 = vperm.xlu0 %419, %v374
    %v421 = vpop.permute.xlu0 %420
    %423 = vset.pattern.permute.xlu0 3
    %424 = vperm.xlu0 %423, %v375
    %v425 = vpop.permute.xlu0 %424
    %v427 = vmul.f32 %v421, %v418
    %v428 = vmul.f32 %v425, %v418
    %v429 = vadd.f32 %v415, %v427
    %v430 = vadd.f32 %v416, %v428
    %vm431 = vcmask 191488
    %v432 = vsel %vm431, %v429, 0.0
    %v433 = vrot.slane %v432, 4
    %v434 = vadd.f32 %v432, %v433
    %v435 = vrot.slane %v434, 2
    %v436 = vadd.f32 %v434, %v435
    %v437 = vrot.slane %v436, 1
    %v438 = vadd.f32 %v436, %v437
    %v439 = vsel %vm431, %v430, 0.0
    %v440 = vrot.slane %v439, 4
    %v441 = vadd.f32 %v439, %v440
    %v442 = vrot.slane %v441, 2
    %v443 = vadd.f32 %v441, %v442
    %v444 = vrot.slane %v443, 1
    %v445 = vadd.f32 %v443, %v444
    %vm446 = vcmask 195584
    %v447 = vsel %vm446, %v438, inf
    %448 = vmin.xlane.f32.xlu0 %v447
    %v449 = vpop.xlane.xlu0 %448
    %v450 = vsel %vm446, %v445, inf
    %451 = vmin.xlane.f32.xlu0 %v450
    %v452 = vpop.xlane.xlu0 %451
    %v453 = vlaneseq
    %v454 = vand.u32 %v453, 127
    %vm455 = vcmp.le.f32.partialorder %v438, %v449
    %vm456 = vcmp.le.f32.partialorder %v445, %v452
    %v457 = vsel %vm455, %v454, 24
    %v458 = vsel %vm456, %v454, 24
    %v459 = vsel %vm446, %v457, 2147483647
    %v460 = vand.u32 %v459, 65535
    %v461 = vshra.s32 %v459, 16
    %v462 = vcvt.s32.f32 %v460
    %v463 = vcvt.s32.f32 %v461
    %464 = vmin.xlane.f32.xlu0 %v463
    %v465 = vpop.xlane.xlu0 %464
    %vm466 = vcmp.eq.f32.partialorder %v463, %v465
    %v467 = vsel %vm466, %v462, inf
    %468 = vmin.xlane.f32.xlu0 %v467
    %v469 = vpop.xlane.xlu0 %468
    %v470 = vcvt.f32.s32 %v469
    %v471 = vcvt.f32.s32 %v465
    %v472 = vshll.u32 %v471, 16
    %v473 = vadd.s32 %v472, %v470
    %v474 = vsel %vm446, %v458, 2147483647
    %v475 = vand.u32 %v474, 65535
    %v476 = vshra.s32 %v474, 16
    %v477 = vcvt.s32.f32 %v475
    %v478 = vcvt.s32.f32 %v476
    %479 = vmin.xlane.f32.xlu0 %v478
    %v480 = vpop.xlane.xlu0 %479
    %vm481 = vcmp.eq.f32.partialorder %v478, %v480
    %v482 = vsel %vm481, %v477, inf
    %483 = vmin.xlane.f32.xlu0 %v482
    %v484 = vpop.xlane.xlu0 %483
    %v485 = vcvt.f32.s32 %v484
    %v486 = vcvt.f32.s32 %v480
    %v487 = vshll.u32 %v486, 16
    %v488 = vadd.s32 %v487, %v485
    %vm489 = vcmp.eq.s32.totalorder %v454, %v473
    %vm490 = vcmp.eq.s32.totalorder %v454, %v488
    %v491 = vsel %vm489, 1, 0
    %v492 = vsel %vm490, 1, 0
    %v493 = vcvt.s32.f32 %v491
    %v494 = vcvt.s32.f32 %v492
    %v495 = vld [vmem:[#allocation5] sm:$0xf]
    %v496 = vmul.f32 %v493, %v495
    %v497 = vmul.f32 %v494, %v495
    %v498 = vsel %vm431, %v496, 0.0
    %499 = vadd.xlane.f32.xlu0 %v498
    %v500 = vpop.xlane.xlu0 %499
    %v501 = vsel %vm431, %v497, 0.0
    %502 = vadd.xlane.f32.xlu0 %v501
    %v503 = vpop.xlane.xlu0 %502
    %v504 = vmul.f32 %v236, %v500
    %v505 = vmul.f32 %v237, %v500
    %v506 = vmul.f32 %v238, %v503
    %v507 = vmul.f32 %v239, %v503
    %v508 = vsel %vm96, %v504, 0.0
    %v509 = vrot.slane %v508, 4
    %v510 = vadd.f32 %v508, %v509
    %v511 = vrot.slane %v510, 2
    %v512 = vadd.f32 %v510, %v511
    %v513 = vrot.slane %v512, 1
    %v514 = vadd.f32 %v512, %v513
    %v515 = vsel %vm96, %v505, 0.0
    %v516 = vrot.slane %v515, 4
    %v517 = vadd.f32 %v515, %v516
    %v518 = vrot.slane %v517, 2
    %v519 = vadd.f32 %v517, %v518
    %v520 = vrot.slane %v519, 1
    %v521 = vadd.f32 %v519, %v520
    %v522 = vsel %vm96, %v506, 0.0
    %v523 = vrot.slane %v522, 4
    %v524 = vadd.f32 %v522, %v523
    %v525 = vrot.slane %v524, 2
    %v526 = vadd.f32 %v524, %v525
    %v527 = vrot.slane %v526, 1
    %v528 = vadd.f32 %v526, %v527
    %v529 = vsel %vm96, %v507, 0.0
    %v530 = vrot.slane %v529, 4
    %v531 = vadd.f32 %v529, %v530
    %v532 = vrot.slane %v531, 2
    %v533 = vadd.f32 %v531, %v532
    %v534 = vrot.slane %v533, 1
    %v535 = vadd.f32 %v533, %v534
    %v536 = vcvt.f32.s32.to.zero.pseudo %v514
    %v537 = vcvt.f32.s32.to.zero.pseudo %v521
    %v538 = vcvt.f32.s32.to.zero.pseudo %v528
    %v539 = vcvt.f32.s32.to.zero.pseudo %v535
    %vm540 = vcmp.eq.s32.totalorder %v223, %v536
    %vm541 = vcmp.eq.s32.totalorder %v223, %v537
    %vm542 = vcmp.eq.s32.totalorder %v223, %v538
    %vm543 = vcmp.eq.s32.totalorder %v223, %v539
    %v544 = vsel %vm540, 1, 0
    %v545 = vsel %vm541, 1, 0
    %v546 = vsel %vm542, 1, 0
    %v547 = vsel %vm543, 1, 0
    %v548 = vcvt.s32.f32 %v544
    %v549 = vcvt.s32.f32 %v545
    %v550 = vcvt.s32.f32 %v546
    %v551 = vcvt.s32.f32 %v547
    %v552 = vadd.f32 %v79, 1e-27
    %v553 = vadd.f32 %v80, 1e-27
    %v554 = vlog2.pop %v552
    %v555 = vmul.f32 %v554, 0.6931472
    %v556 = vlog2.pop %v553
    %v557 = vmul.f32 %v556, 0.6931472
    %560 = vst [vmem:[#allocation1] ss:$2 sm:$0xff] %v555
    %v561 = vld.sshfl [vmem:[#allocation1] sm:$0xff pattern:$0x75316420]
    %v562 = vld.sshfl [vmem:[#allocation1 + $0x8] sm:$0xff pattern:$0x75316420]
    %s563 = scalar_lea.vmem [#allocation1], 16
    %564 = vst [vmem:[%s563] ss:$2 sm:$0xff] %v557
    %v565 = vld.sshfl [vmem:[#allocation1 + $0x10] sm:$0xff pattern:$0x75316420]
    %v566 = vld.sshfl [vmem:[#allocation1 + $0x18] sm:$0xff pattern:$0x75316420]
    %v571 = vmul.f32 %v548, %v561
    %v572 = vmul.f32 %v549, %v562
    %v573 = vmul.f32 %v550, %v565
    %v574 = vmul.f32 %v551, %v566
    %v575 = vsel %vm96, %v571, 0.0
    %v576 = vrot.slane %v575, 4
    %v577 = vadd.f32 %v575, %v576
    %v578 = vrot.slane %v577, 2
    %v579 = vadd.f32 %v577, %v578
    %v580 = vrot.slane %v579, 1
    %v581 = vadd.f32 %v579, %v580
    %v582 = vsel %vm96, %v572, 0.0
    %v583 = vrot.slane %v582, 4
    %v584 = vadd.f32 %v582, %v583
    %v585 = vrot.slane %v584, 2
    %v586 = vadd.f32 %v584, %v585
    %v587 = vrot.slane %v586, 1
    %v588 = vadd.f32 %v586, %v587
    %v589 = vsel %vm96, %v573, 0.0
    %v590 = vrot.slane %v589, 4
    %v591 = vadd.f32 %v589, %v590
    %v592 = vrot.slane %v591, 2
    %v593 = vadd.f32 %v591, %v592
    %v594 = vrot.slane %v593, 1
    %v595 = vadd.f32 %v593, %v594
    %v596 = vsel %vm96, %v574, 0.0
    %v597 = vrot.slane %v596, 4
    %v598 = vadd.f32 %v596, %v597
    %v599 = vrot.slane %v598, 2
    %v600 = vadd.f32 %v598, %v599
    %v601 = vrot.slane %v600, 1
    %v602 = vadd.f32 %v600, %v601
    %v603 = vadd.f32 %v581, %v588
    %604 = vadd.xlane.f32.xlu0 %v603
    %v605 = vpop.xlane.xlu0 %604
    %v606 = vadd.f32 %v595, %v602
    %607 = vadd.xlane.f32.xlu0 %v606
    %v608 = vpop.xlane.xlu0 %607
    %v609 = vsub.f32 0.0, %v605
    %v610 = vsub.f32 0.0, %v608
    %v611 = vmul.f32 %v609, 0.00390625
    %v612 = vmul.f32 %v610, 0.00390625
    %vm613 = vcmp.ge.f32.partialorder %v79, %v131
    %vm614 = vcmp.ge.f32.partialorder %v80, %v132
    %v616 = vunpack.c.l.s4 839922192
    %v617 = vunpack.c.0.s8 %v616
    %v618 = vperm.slane %v223, %v617
    %v619 = vsel %vm613, %v618, 4
    %v620 = vsel %vm614, %v618, 4
    %621 = vst [vmem:[#allocation1] ss:$2 sm:$0xff] %v619
    %v622 = vld.sshfl [vmem:[#allocation1] sm:$0xff pattern:$0x75316420]
    %v623 = vld.sshfl [vmem:[#allocation1 + $0x8] sm:$0xff pattern:$0x75316420]
    %s624 = scalar_lea.vmem [#allocation1], 16
    %625 = vst [vmem:[%s624] ss:$2 sm:$0xff] %v620
    %v626 = vld.sshfl [vmem:[#allocation1 + $0x10] sm:$0xff pattern:$0x75316420]
    %v627 = vld.sshfl [vmem:[#allocation1 + $0x18] sm:$0xff pattern:$0x75316420]
    %v628 = vsel %vm96, %v622, 2147483647
    %v629 = vrot.slane %v628, 4
    %vm630 = vcmp.lt.s32.totalorder %v628, %v629
    %v631 = vsel %vm630, %v628, %v629
    %v632 = vrot.slane %v631, 2
    %vm633 = vcmp.lt.s32.totalorder %v631, %v632
    %v634 = vsel %vm633, %v631, %v632
    %v635 = vrot.slane %v634, 1
    %vm636 = vcmp.lt.s32.totalorder %v634, %v635
    %v637 = vsel %vm636, %v634, %v635
    %v638 = vsel %vm96, %v623, 2147483647
    %v639 = vrot.slane %v638, 4
    %vm640 = vcmp.lt.s32.totalorder %v638, %v639
    %v641 = vsel %vm640, %v638, %v639
    %v642 = vrot.slane %v641, 2
    %vm643 = vcmp.lt.s32.totalorder %v641, %v642
    %v644 = vsel %vm643, %v641, %v642
    %v645 = vrot.slane %v644, 1
    %vm646 = vcmp.lt.s32.totalorder %v644, %v645
    %v647 = vsel %vm646, %v644, %v645
    %v648 = vsel %vm96, %v626, 2147483647
    %v649 = vrot.slane %v648, 4
    %vm650 = vcmp.lt.s32.totalorder %v648, %v649
    %v651 = vsel %vm650, %v648, %v649
    %v652 = vrot.slane %v651, 2
    %vm653 = vcmp.lt.s32.totalorder %v651, %v652
    %v654 = vsel %vm653, %v651, %v652
    %v655 = vrot.slane %v654, 1
    %vm656 = vcmp.lt.s32.totalorder %v654, %v655
    %v657 = vsel %vm656, %v654, %v655
    %v658 = vsel %vm96, %v627, 2147483647
    %v659 = vrot.slane %v658, 4
    %vm660 = vcmp.lt.s32.totalorder %v658, %v659
    %v661 = vsel %vm660, %v658, %v659
    %v662 = vrot.slane %v661, 2
    %vm663 = vcmp.lt.s32.totalorder %v661, %v662
    %v664 = vsel %vm663, %v661, %v662
    %v665 = vrot.slane %v664, 1
    %vm666 = vcmp.lt.s32.totalorder %v664, %v665
    %v667 = vsel %vm666, %v664, %v665
    %vm668 = vcmp.ne.s32.totalorder %v637, %v536
    %vm669 = vcmp.ne.s32.totalorder %v647, %v537
    %vm670 = vcmp.ne.s32.totalorder %v657, %v538
    %vm671 = vcmp.ne.s32.totalorder %v667, %v539
    %v672 = vsel %vm668, 1, 0
    %v673 = vsel %vm669, 1, 0
    %v674 = vsel %vm670, 1, 0
    %v675 = vsel %vm671, 1, 0
    %v676 = vcvt.s32.f32 %v672
    %v677 = vcvt.s32.f32 %v673
    %v678 = vcvt.s32.f32 %v674
    %v679 = vcvt.s32.f32 %v675
    %v680 = vadd.f32 %v676, %v677
    %681 = vadd.xlane.f32.xlu0 %v680
    %v682 = vpop.xlane.xlu0 %681
    %v683 = vadd.f32 %v678, %v679
    %684 = vadd.xlane.f32.xlu0 %v683
    %v685 = vpop.xlane.xlu0 %684
    %vm686 = vcmp.gt.f32.partialorder %v682, 0.0
    %vm687 = vcmp.gt.f32.partialorder %v685, 0.0
    %v688 = vsel %vm686, 1, 0
    %v689 = vsel %vm687, 1, 0
    %v690 = vcvt.s32.f32 %v688
    %v691 = vcvt.s32.f32 %v689
    %v692 = vmul.f32 %v611, %v690
    %v693 = vmul.f32 %v612, %v691
    %vm694 = vcmask 0
    %v695 = vsel %vm694, %v692, 0.0
    %v696 = vsel %vm694, %v693, 0.0
    %v697 = vadd.f32 %v695, %v696
    %698 = vadd.xlane.f32.xlu0 %v697
    %v699 = vpop.xlane.xlu0 %698
    %v700 = vrot.slane %v699, 4
    %v701 = vadd.f32 %v699, %v700
    %v702 = vrot.slane %v701, 2
    %v703 = vadd.f32 %v701, %v702
    %v704 = vrot.slane %v703, 1
    %v705 = vadd.f32 %v703, %v704
    %s706 = vtos %v705
    %v707 = vstv %s706
    %v708 = vadd.f32 %v707, 0.0
    %709 = vst [vmem:[#allocation10] sm:$0xff] %v708
    // Predicated region
    $region34: #{tpu_custom_call.1} parent=1 // pred_check
      _
    $region35: #{tpu_custom_call.1} parent=1 // pred_check_branch
      %711 = sbr.rel (0) target = $region37
    $region36: #{tpu_custom_call.1} parent=1 // pred_region
      %713 = vsyncadd [#allocation4], 0
      %s715 = sshll.u32 [#allocation10], 4
      %s716 = int_to_ptr.vmem [resolvable:$true] %s715
      %s717 = sshll.u32 %s4, 4
      %s718 = int_to_ptr.hbm [resolvable:$true] %s717
      %720 = dma.vmem_to_hbm [thread:$0]  %s716, 128, %s718, [#allocation4]
    $region37: #{tpu_custom_call.1} parent=1 // pred_fallthru
      _
    // Predicated region
    $region38: #{tpu_custom_call.1} parent=1 // pred_check
      _
    $region39: #{tpu_custom_call.1} parent=1 // pred_check_branch
      %722 = sbr.rel (0) target = $region41
    $region40: #{tpu_custom_call.1} parent=1 // pred_region
      %724 = dma.done [#allocation4], 128
    $region41: #{tpu_custom_call.1} parent=1 // pred_fallthru
      _
    %725 = vsyncpa [#allocation3], 1
    %726 = vsyncpa [#allocation6], 1
    %727 = vsyncpa [#allocation9], 1
    %728 = vsyncpa [#allocation4], 1

</llo_original>
